<compile_context>
chip_gen: v6e
topology: v6e:2x2x1
jax: 0.10.0
libtpu: 0.0.40
codegen_flags: <defaults>
</compile_context>

<pallas_src>
import jax
import jax.numpy as jnp
from jax.experimental import pallas as pl
from jax.experimental.pallas import tpu as pltpu

INPUT_SIZE = 10
OUTPUT_SIZE = 5
N_PAD = 128            # lane-dense padded width for the in-kernel matmul
BATCH_TILE = 4096      # rows per grid step (>= overhead-optimal tile size)
VMEM_LIMIT_BYTES = 32 * 1024 * 1024  # explicit scoped-VMEM budget (v5e default is 16 MiB)


def linear_kernel(x_ref, w_ref, b_ref, o_ref):
    # x: (tile, INPUT_SIZE)  w: (INPUT_SIZE, N_PAD)  b: (1, N_PAD)
    # o: (tile, OUTPUT_SIZE)
    # One MXU matmul on a full 128-lane tile; bias add rides a VALU slot.
    # Only the first OUTPUT_SIZE columns are stored (output array is (B, 5)).
    x = x_ref[...]
    w = w_ref[...]
    b = b_ref[...]
    y = jnp.dot(x, w, preferred_element_type=jnp.float32) + b
    o_ref[...] = y[:, :OUTPUT_SIZE].astype(o_ref.dtype)


def small_model_forward(x, w_pad, b_pad):
    """x: (B, INPUT_SIZE) f32, w_pad: (INPUT_SIZE, N_PAD), b_pad: (1, N_PAD).

    Returns (B, OUTPUT_SIZE) = x @ W^T + b (torch.nn.Linear semantics).
    """
    B = x.shape[0]
    # Single code path: whole-batch block for small B, fixed tile + cdiv grid
    # for large B (partial last block is masked by Pallas). For B > BATCH_TILE
    # the grid has >= 2 steps, so "parallel" can shard it across v7x's 2 TCs.
    tile = B if B <= BATCH_TILE else BATCH_TILE
    grid = (pl.cdiv(B, tile),)

    # Advisory cost: x and out rows are lane-padded to 128 in HBM; the matmul
    # actually runs at the padded width.
    cost = pl.CostEstimate(
        flops=2 * B * INPUT_SIZE * N_PAD,
        transcendentals=0,
        bytes_accessed=4 * (B * N_PAD            # x (lane-padded rows)
                            + INPUT_SIZE * N_PAD  # weight
                            + N_PAD               # bias
                            + B * N_PAD),         # output (lane-padded rows)
    )

    return pl.pallas_call(
        linear_kernel,
        out_shape=jax.ShapeDtypeStruct((B, OUTPUT_SIZE), x.dtype),
        grid=grid,
        in_specs=[
            pl.BlockSpec((tile, INPUT_SIZE), lambda i: (i, 0)),
            pl.BlockSpec((INPUT_SIZE, N_PAD), lambda i: (0, 0)),  # resident
            pl.BlockSpec((1, N_PAD), lambda i: (0, 0)),           # resident
        ],
        out_specs=pl.BlockSpec((tile, OUTPUT_SIZE), lambda i: (i, 0)),
        compiler_params=pltpu.CompilerParams(
            dimension_semantics=("parallel",),
            vmem_limit_bytes=VMEM_LIMIT_BYTES,
        ),
        cost_estimate=cost,
    )(x, w_pad, b_pad)


def init_params(key):
    """Deterministic init mirroring torch.nn.Linear(input_size, output_size):
    weight (out, in) ~ U(-1/sqrt(in), 1/sqrt(in)), bias (out,) same range."""
    kw, kb = jax.random.split(key)
    bound = 1.0 / (INPUT_SIZE ** 0.5)
    weight = jax.random.uniform(
        kw, (OUTPUT_SIZE, INPUT_SIZE), jnp.float32, minval=-bound, maxval=bound
    )
    bias = jax.random.uniform(
        kb, (OUTPUT_SIZE,), jnp.float32, minval=-bound, maxval=bound
    )
    return weight, bias


def pad_params(weight, bias):
    """torch layout (out, in)/(out,) -> lane-dense kernel layout
    (in, N_PAD)/(1, N_PAD) with zero padding in the extra output columns."""
    w_t = weight.T                                        # (in, out)
    w_pad = jnp.zeros((INPUT_SIZE, N_PAD), jnp.float32).at[:, :OUTPUT_SIZE].set(w_t)
    b_pad = jnp.zeros((1, N_PAD), jnp.float32).at[0, :OUTPUT_SIZE].set(bias)
    return w_pad, b_pad


if __name__ == "__main__":
    key = jax.random.PRNGKey(0)
    k_x, k_p = jax.random.split(key)

    batch = 8
    x = jax.random.normal(k_x, (batch, INPUT_SIZE), jnp.float32)

    weight, bias = init_params(k_p)          # torch layout: (out, in), (out,)
    w_pad, b_pad = pad_params(weight, bias)  # lane-dense kernel layout

    out = small_model_forward(x, w_pad, b_pad)
    out = jax.block_until_ready(out)

    # Reference check in plain JAX (same math as torch Linear: x @ W^T + b).
    ref = x @ weight.T + bias
    assert out.shape == (batch, OUTPUT_SIZE)
    assert jnp.allclose(out, ref, atol=1e-5, rtol=1e-5)

    print("KERNEL_OK")
</pallas_src>

<mosaic_0001>
module attributes {stable_mosaic.version = 11 : i64} {
  func.func @linear_kernel(%arg0: i32, %arg1: memref<8x10xf32, #tpu.memory_space<vmem>>, %arg2: memref<10x128xf32, #tpu.memory_space<vmem>>, %arg3: memref<1x128xf32, #tpu.memory_space<vmem>>, %arg4: memref<8x5xf32, #tpu.memory_space<vmem>>) attributes {dimension_semantics = [#tpu.dimension_semantics<parallel>], iteration_bounds = array<i64: 1>, scalar_prefetch = 0 : i64, scratch_operands = 0 : i64, tpu.core_type = #tpu.core_type<tc>, window_params = [{transform_indices = @transform_0, window_bounds = array<i64: 8, 10>}, {pipeline_mode = #tpu.pipeline_mode<synchronous>, transform_indices = @transform_1, window_bounds = array<i64: 10, 128>}, {pipeline_mode = #tpu.pipeline_mode<synchronous>, transform_indices = @transform_2, window_bounds = array<i64: 1, 128>}, {transform_indices = @transform_3, window_bounds = array<i64: 8, 5>}]} {
    %c0 = arith.constant 0 : index
    %c0_0 = arith.constant 0 : index
    %0 = vector.load %arg1[%c0, %c0_0] : memref<8x10xf32, #tpu.memory_space<vmem>>, vector<8x10xf32>
    %c0_1 = arith.constant 0 : index
    %c0_2 = arith.constant 0 : index
    %1 = vector.load %arg2[%c0_1, %c0_2] : memref<10x128xf32, #tpu.memory_space<vmem>>, vector<10x128xf32>
    %c0_3 = arith.constant 0 : index
    %c0_4 = arith.constant 0 : index
    %2 = vector.load %arg3[%c0_3, %c0_4] : memref<1x128xf32, #tpu.memory_space<vmem>>, vector<1x128xf32>
    %cst = arith.constant dense<0.000000e+00> : vector<8x128xf32>
    %3 = tpu.matmul %0, %1, %cst {dimension_numbers = #tpu.dot_dimension_numbers<[1], [0], [0], [1], [0, 0, 1, 1], [], []>} : vector<8x10xf32>, vector<10x128xf32>, vector<8x128xf32> -> vector<8x128xf32>
    %4 = vector.broadcast %2 : vector<1x128xf32> to vector<8x128xf32>
    %5 = arith.addf %3, %4 : vector<8x128xf32>
    %6 = vector.extract_strided_slice %5 {offsets = [0, 0], sizes = [8, 5], strides = [1, 1]} : vector<8x128xf32> to vector<8x5xf32>
    %c0_5 = arith.constant 0 : index
    %c0_6 = arith.constant 0 : index
    %7 = vector.load %arg4[%c0_5, %c0_6] : memref<8x5xf32, #tpu.memory_space<vmem>>, vector<8x5xf32>
    tpu.vector_store %arg4[%c0_5, %c0_6], %6 {strides = array<i32>} : memref<8x5xf32, #tpu.memory_space<vmem>>, vector<8x5xf32>,
    return
  }
  func.func @transform_0(%arg0: i32) -> (i32, i32) {
    %c0_i32 = arith.constant 0 : i32
    %c0_i32_0 = arith.constant 0 : i32
    return %arg0, %c0_i32 : i32, i32
  }
  func.func @transform_1(%arg0: i32) -> (i32, i32) {
    %c0_i32 = arith.constant 0 : i32
    %c0_i32_0 = arith.constant 0 : i32
    %c0_i32_1 = arith.constant 0 : i32
    return %c0_i32, %c0_i32_0 : i32, i32
  }
  func.func @transform_2(%arg0: i32) -> (i32, i32) {
    %c0_i32 = arith.constant 0 : i32
    %c0_i32_0 = arith.constant 0 : i32
    %c0_i32_1 = arith.constant 0 : i32
    return %c0_i32, %c0_i32_0 : i32, i32
  }
  func.func @transform_3(%arg0: i32) -> (i32, i32) {
    %c0_i32 = arith.constant 0 : i32
    %c0_i32_0 = arith.constant 0 : i32
    return %arg0, %c0_i32 : i32, i32
  }
}

</mosaic_0001>

<llo_original>
// kernel: tpu_custom_call.1
$region0: #{tpu_custom_call.1}
  #allocation0 [shape = 'u32[]', space=smem, size = 0x4, offset = 0x4, fixed_abs, tag = 'smem constant byte address 0x4 - core index']
  #allocation1 [shape = 'u32[144,128]{1,0:T(1,128)}', space=vmem, size = 0x12000, scoped, tag = 'internal scratch']
  %s0 = inlined_call_operand.hbm [shape: f32[8,10], index: 0, kind: input, shape index: {}]
  %s1 = inlined_call_operand.hbm [shape: f32[10,128], index: 1, kind: input, shape index: {}]
  %s2 = inlined_call_operand.vmem [shape: f32[1,128], index: 2, kind: input, shape index: {}]
  %s3 = inlined_call_operand.hbm [shape: f32[8,5], index: 3, kind: output, shape index: {}]
  %s4 = sld [smem:[#allocation0]]
  $region30: #{tpu_custom_call.1} parent=0
    _
  %s6 = ssub.s32 1, %s4
  %s7 = scalar_select 0, %s6, %s4
  $region1: #{tpu_custom_call.1} parent=0
    #allocation2 [shape = 'u8[4096]{0}', space=vmem, size = 0x1000, scoped, tag = 'input window, operand 0, single buffered']
    #allocation3 [shape = 's32[1]{0}', space=sflag, size = 0x4, scoped, tag = 'scoped memory for tpu_custom_call.1']
    #allocation4 [shape = 's32[1]{0}', space=sflag, size = 0x4, scoped, tag = 'scoped memory for tpu_custom_call.1']
    #allocation5 [shape = 'u8[8192]{0}', space=vmem, size = 0x2000, scoped, tag = 'input window, operand 1, single buffered']
    #allocation6 [shape = 's32[1]{0}', space=sflag, size = 0x4, scoped, tag = 'scoped memory for tpu_custom_call.1']
    #allocation7 [shape = 'u8[4096]{0}', space=vmem, size = 0x1000, scoped, tag = 'output window, operand 0, single buffered']
    %8 = vsyncpa [#allocation3], 0
    %9 = vsyncpa [#allocation6], 0
    %10 = vsyncpa [#allocation4], 0
    // Predicated region
    $region2: #{tpu_custom_call.1} parent=1 // pred_check
      _
    $region3: #{tpu_custom_call.1} parent=1 // pred_check_branch
      %12 = sbr.rel (0) target = $region5
    $region4: #{tpu_custom_call.1} parent=1 // pred_region
      %s14 = ssub.s32 128, 128
      %15 = vsyncadd [#allocation3], %s14
      %s17 = sshll.u32 [#allocation2], 4
      %s18 = int_to_ptr.vmem [resolvable:$true] %s17
      %20 = dma.hbm_to_vmem [thread:$0]  %s0, 128, %s18, [#allocation3]
    $region5: #{tpu_custom_call.1} parent=1 // pred_fallthru
      _
    // Predicated region
    $region6: #{tpu_custom_call.1} parent=1 // pred_check
      _
    $region7: #{tpu_custom_call.1} parent=1 // pred_check_branch
      %22 = sbr.rel (0) target = $region9
    $region8: #{tpu_custom_call.1} parent=1 // pred_region
      %s24 = ssub.s32 256, 256
      %25 = vsyncadd [#allocation6], %s24
      %s26 = sshll.u32 [#allocation5], 4
      %s27 = int_to_ptr.vmem [resolvable:$true] %s26
      %32 = dma.hbm_to_vmem [thread:$0]  %s1, 256, %s27, [#allocation6], 128, 128, 8
    $region9: #{tpu_custom_call.1} parent=1 // pred_fallthru
      _
    // Predicated region
    $region10: #{tpu_custom_call.1} parent=1 // pred_check
      _
    $region11: #{tpu_custom_call.1} parent=1 // pred_check_branch
      %34 = sbr.rel (0) target = $region13
    $region12: #{tpu_custom_call.1} parent=1 // pred_region
      _
    $region13: #{tpu_custom_call.1} parent=1 // pred_fallthru
      _
    // Predicated region
    $region14: #{tpu_custom_call.1} parent=1 // pred_check
      _
    $region15: #{tpu_custom_call.1} parent=1 // pred_check_branch
      %36 = sbr.rel (0) target = $region17
    $region16: #{tpu_custom_call.1} parent=1 // pred_region
      %37 = dma.done [#allocation3], 128
    $region17: #{tpu_custom_call.1} parent=1 // pred_fallthru
      _
    // Predicated region
    $region18: #{tpu_custom_call.1} parent=1 // pred_check
      _
    $region19: #{tpu_custom_call.1} parent=1 // pred_check_branch
      %39 = sbr.rel (0) target = $region21
    $region20: #{tpu_custom_call.1} parent=1 // pred_region
      %40 = dma.done [#allocation6], 256
    $region21: #{tpu_custom_call.1} parent=1 // pred_fallthru
      _
    %v41 = vld [vmem:[#allocation2] sm:$0xff]
    %v42 = vld [vmem:[#allocation5] sm:$0xff]
    %v43 = vld [vmem:[#allocation5 + $0x8] sm:$0x3]
    %v44 = vld [vmem:[%s2] sm:$0x1]
    %v46 = vlaneseq
    %v47 = vshrl.u32 %v46, 7
    %v48 = vsub.s32 0, %v47
    %v49 = vrot.slane %v44, %v48
    %vm51 = vcmask 80896
    %v53 = vsel %vm51, %v41, 0
    %vm55 = vcmask 1041408
    %v57 = vsel %vm55, %v43, 0
    %59 = vmatprep.subr.mxu0 0.0
    %60 = vmatpush1.msra.mxu0 0.0
    %61 = vmatprep.subr.mxu0 0.0
    %62 = vmatpush1.msra.mxu0 0.0
    %63 = vmatprep.subr.mxu0 0.0
    %64 = vmatpush1.msra.mxu0 0.0
    %65 = vmatprep.subr.mxu0 0.0
    %66 = vmatpush1.msra.mxu0 0.0
    %67 = vmatprep.subr.mxu0 0.0
    %68 = vmatpush1.msra.mxu0 0.0
    %69 = vmatprep.subr.mxu0 0.0
    %70 = vmatpush1.msra.mxu0 0.0
    %71 = vmatprep.subr.mxu0 0.0
    %72 = vmatpush1.msra.mxu0 0.0
    %73 = vmatprep.subr.mxu0 0.0
    %74 = vmatpush1.msra.mxu0 0.0
    %75 = vmatprep.subr.mxu0 0.0
    %76 = vmatpush1.msra.mxu0 0.0
    %77 = vmatprep.subr.mxu0 0.0
    %78 = vmatpush1.msra.mxu0 0.0
    %79 = vmatprep.subr.mxu0 0.0
    %80 = vmatpush1.msra.mxu0 0.0
    %81 = vmatprep.subr.mxu0 0.0
    %82 = vmatpush1.msra.mxu0 0.0
    %83 = vmatprep.subr.mxu0 0.0
    %84 = vmatpush1.msra.mxu0 0.0
    %85 = vmatprep.subr.mxu0 0.0
    %86 = vmatpush1.msra.mxu0 0.0
    %87 = vmatprep.subr.mxu0 0.0
    %88 = vmatpush1.msra.mxu0 %v57
    %89 = vmatprep.subr.mxu0 0.0
    %90 = vmatpush1.msra.mxu0 %v42
    %91 = vmatprep.subr.mxu0 0.0
    %92 = vmatpush2.msra.mxu0 0.0
    %93 = vmatprep.subr.mxu0 0.0
    %94 = vmatpush2.msra.mxu0 0.0
    %95 = vmatprep.subr.mxu0 0.0
    %96 = vmatpush2.msra.mxu0 0.0
    %97 = vmatprep.subr.mxu0 0.0
    %98 = vmatpush2.msra.mxu0 0.0
    %99 = vmatprep.subr.mxu0 0.0
    %100 = vmatpush2.msra.mxu0 0.0
    %101 = vmatprep.subr.mxu0 0.0
    %102 = vmatpush2.msra.mxu0 0.0
    %103 = vmatprep.subr.mxu0 0.0
    %104 = vmatpush2.msra.mxu0 0.0
    %105 = vmatprep.subr.mxu0 0.0
    %106 = vmatpush2.msra.mxu0 0.0
    %107 = vmatprep.subr.mxu0 0.0
    %108 = vmatpush2.msra.mxu0 0.0
    %109 = vmatprep.subr.mxu0 0.0
    %110 = vmatpush2.msra.mxu0 0.0
    %111 = vmatprep.subr.mxu0 0.0
    %112 = vmatpush2.msra.mxu0 0.0
    %113 = vmatprep.subr.mxu0 0.0
    %114 = vmatpush2.msra.mxu0 0.0
    %115 = vmatprep.subr.mxu0 0.0
    %116 = vmatpush2.msra.mxu0 0.0
    %117 = vmatprep.subr.mxu0 0.0
    %118 = vmatpush2.msra.mxu0 0.0
    %119 = vmatprep.subr.mxu0 0.0
    %120 = vmatpush2.msra.mxu0 0.0
    %121 = vmatprep.subr.mxu0 0.0
    %122 = vmatpush2.msra.mxu0 0.0
    %123 = vmatprep.mubr.f32.mxu0 0.0
    %124 = vmatmul.mubr.f32.gmra.mxu0 %v53
    %v125 = vpop.f32.mrf.mxu0
    %v126 = vadd.f32 %v49, %v125
    %v127 = vpop.f32.mrf.mxu0
    %128 = vdwg.mxu0
    %vm129 = vcmask 39936
    %130 = vst.msk [vmem:[#allocation7] sm:$0xff] %vm129, %v126
    // Predicated region
    $region22: #{tpu_custom_call.1} parent=1 // pred_check
      _
    $region23: #{tpu_custom_call.1} parent=1 // pred_check_branch
      %132 = sbr.rel (0) target = $region25
    $region24: #{tpu_custom_call.1} parent=1 // pred_region
      %s134 = ssub.s32 128, 128
      %135 = vsyncadd [#allocation4], %s134
      %s137 = sshll.u32 [#allocation7], 4
      %s138 = int_to_ptr.vmem [resolvable:$true] %s137
      %140 = dma.vmem_to_hbm [thread:$0]  %s138, 128, %s3, [#allocation4]
    $region25: #{tpu_custom_call.1} parent=1 // pred_fallthru
      _
    // Predicated region
    $region26: #{tpu_custom_call.1} parent=1 // pred_check
      _
    $region27: #{tpu_custom_call.1} parent=1 // pred_check_branch
      %142 = sbr.rel (0) target = $region29
    $region28: #{tpu_custom_call.1} parent=1 // pred_region
      %143 = dma.done [#allocation4], 128
    $region29: #{tpu_custom_call.1} parent=1 // pred_fallthru
      _
    %144 = vsyncpa [#allocation3], 1
    %145 = vsyncpa [#allocation6], 1
    %146 = vsyncpa [#allocation4], 1

</llo_original>
